<compile_context>
chip_gen: v6e
topology: v6e:2x2x1
jax: 0.10.0
libtpu: 0.0.40
codegen_flags: <defaults>
</compile_context>

<pallas_src>
import functools

import jax
import jax.numpy as jnp
from jax.experimental import pallas as pl
from jax.experimental.pallas import tpu as pltpu


def _round_up(n, m):
    return ((n + m - 1) // m) * m


def _policy_kernel(x_ref,
                   w1, b1, w2, b2, w3, b3, w4, b4, w5, b5,
                   o_ref, *, compute_dtype):
    """Fused 5-layer MLP on one feature-major batch tile.

    x_ref: (inputs, tile_b)      -- batch on the lane axis
    wK:    (outK, inK) weights (nn.Linear layout), compute_dtype, VMEM-resident
    bK:    (outK, 1) biases, f32, broadcast along lanes
    o_ref: (actions, tile_b) f32
    """
    w_refs = (w1, w2, w3, w4, w5)
    b_refs = (b1, b2, b3, b4, b5)
    n_layers = len(w_refs)

    h = x_ref[...].astype(compute_dtype)                  # (in, tile_b)
    for li in range(n_layers):
        # MXU matmul in compute_dtype with f32 accumulation; N (lane) = tile_b.
        y = jnp.dot(w_refs[li][...], h, preferred_element_type=jnp.float32)
        y = y + b_refs[li][...]                            # (out,1) lane-broadcast, f32
        if li < n_layers - 1:
            h = jnp.maximum(y, 0.0).astype(compute_dtype)  # elementwise stays f32-safe
        else:
            h = y
    o_ref[...] = h.astype(o_ref.dtype)


def policy_net_forward(x, params, *, tile_b=4096, compute_dtype=jnp.bfloat16):
    """x: (B, inputs) f32; params: list of (W:(out,in), b:(out,)) as in nn.Linear."""
    batch, inputs = x.shape
    actions = params[-1][0].shape[0]

    # ---- batch-tile selection (batch is the lane axis) ----------------------
    if batch <= 128:
        tile_b = batch                       # one tile == full array dim (legal block)
    else:
        tile_b = min(tile_b, _round_up(batch, 128))
        if _round_up(batch, tile_b) // tile_b < 2:
            # Ensure >=2 grid steps so the "parallel" batch axis can split
            # across both TensorCores on v7x (harmless on v5e/v6e).
            tile_b = _round_up(pl.cdiv(batch, 2), 128)
    batch_p = _round_up(batch, tile_b)
    grid = (batch_p // tile_b,)

    # ---- feature-major input: (inputs, batch), cast once to operand dtype ---
    x_t = x.T.astype(compute_dtype)
    if batch_p != batch:
        x_t = jnp.pad(x_t, ((0, 0), (0, batch_p - batch)))

    # Parameters: whole-array blocks, constant index_map -> DMA'd once, stay
    # resident in VMEM across all batch tiles.
    flat_params = []
    for w, b in params:
        flat_params.append(w.astype(compute_dtype))                # (out, in)
        flat_params.append(b.reshape(-1, 1).astype(jnp.float32))   # (out, 1)

    in_specs = [pl.BlockSpec((inputs, tile_b), lambda i: (0, i))]
    in_specs += [pl.BlockSpec(p.shape, lambda i: (0, 0)) for p in flat_params]
    out_spec = pl.BlockSpec((actions, tile_b), lambda i: (0, i))

    flops = 2 * batch_p * sum(w.shape[0] * w.shape[1] for w, _ in params)
    bytes_accessed = (x_t.size * x_t.dtype.itemsize
                      + actions * batch_p * 4
                      + sum(p.size * p.dtype.itemsize for p in flat_params))

    kernel = functools.partial(_policy_kernel, compute_dtype=compute_dtype)

    out_t = pl.pallas_call(
        kernel,
        out_shape=jax.ShapeDtypeStruct((actions, batch_p), jnp.float32),
        grid=grid,
        in_specs=in_specs,
        out_specs=out_spec,
        compiler_params=pltpu.CompilerParams(
            dimension_semantics=("parallel",)),
        cost_estimate=pl.CostEstimate(
            flops=flops, transcendentals=0, bytes_accessed=bytes_accessed),
    )(x_t, *flat_params)

    # (actions, batch_p) -> (batch, actions); tiny (8 B/row) readback.
    return out_t[:, :batch].T


def init_params(key, inputs, actions, hidden_size):
    """Deterministic init mimicking torch.nn.Linear: U(-1/sqrt(fan_in), 1/sqrt(fan_in)).

    Weights are kept in the native nn.Linear (out, in) layout.
    """
    dims = [
        (inputs, hidden_size),
        (hidden_size, hidden_size),
        (hidden_size, 2 * hidden_size),
        (2 * hidden_size, hidden_size),
        (hidden_size, actions),
    ]
    params = []
    for fan_in, fan_out in dims:
        key, kw, kb = jax.random.split(key, 3)
        bound = 1.0 / (fan_in ** 0.5)
        w = jax.random.uniform(kw, (fan_out, fan_in), jnp.float32, -bound, bound)
        b = jax.random.uniform(kb, (fan_out,), jnp.float32, -bound, bound)
        params.append((w, b))
    return params


def reference_forward(x, params):
    h = x
    for i, (w, b) in enumerate(params):
        h = h @ w.T + b
        if i < len(params) - 1:
            h = jnp.maximum(h, 0.0)
    return h


# TODO(synk): PolicyNet.action() (host numpy->tensor conversion + torch.log of
# the raw logits) is a host-side wrapper, not part of forward(); not kernelized.

if __name__ == "__main__":
    key = jax.random.PRNGKey(0)
    k_params, k_x_small, k_x_large = jax.random.split(key, 3)

    inputs, actions, hidden_size = 4, 2, 32
    params = init_params(k_params, inputs, actions, hidden_size)

    # Small case (original module's tiny shapes), exact f32 path, tight check.
    x_small = jax.random.normal(k_x_small, (8, inputs), jnp.float32)
    out_small = jax.block_until_ready(
        policy_net_forward(x_small, params, compute_dtype=jnp.float32))
    ref_small = reference_forward(x_small, params)
    assert out_small.shape == (8, actions), out_small.shape
    assert jnp.allclose(out_small, ref_small, atol=1e-4, rtol=1e-4), "small f32 mismatch"

    # Larger batch exercising the batch grid (2 tiles of 1024 lanes), f32 path.
    x_large = jax.random.normal(k_x_large, (2048, inputs), jnp.float32)
    out_large = jax.block_until_ready(
        policy_net_forward(x_large, params, compute_dtype=jnp.float32))
    ref_large = reference_forward(x_large, params)
    assert out_large.shape == (2048, actions), out_large.shape
    assert jnp.allclose(out_large, ref_large, atol=1e-4, rtol=1e-4), "large f32 mismatch"

    # Default path: bf16 MXU operands, f32 accumulation/elementwise — loose check.
    out_bf16 = jax.block_until_ready(policy_net_forward(x_large, params))
    assert out_bf16.shape == (2048, actions), out_bf16.shape
    assert jnp.allclose(out_bf16, ref_large, atol=1e-1, rtol=1e-1), "bf16 mismatch"

    print("KERNEL_OK")
</pallas_src>

<mosaic_0001>
module attributes {stable_mosaic.version = 11 : i64} {
  func.func @_policy_kernel(%arg0: i32, %arg1: memref<4x8xf32, #tpu.memory_space<vmem>>, %arg2: memref<32x4xf32, #tpu.memory_space<vmem>>, %arg3: memref<32x1xf32, #tpu.memory_space<vmem>>, %arg4: memref<32x32xf32, #tpu.memory_space<vmem>>, %arg5: memref<32x1xf32, #tpu.memory_space<vmem>>, %arg6: memref<64x32xf32, #tpu.memory_space<vmem>>, %arg7: memref<64x1xf32, #tpu.memory_space<vmem>>, %arg8: memref<32x64xf32, #tpu.memory_space<vmem>>, %arg9: memref<32x1xf32, #tpu.memory_space<vmem>>, %arg10: memref<2x32xf32, #tpu.memory_space<vmem>>, %arg11: memref<2x1xf32, #tpu.memory_space<vmem>>, %arg12: memref<2x8xf32, #tpu.memory_space<vmem>>) attributes {dimension_semantics = [#tpu.dimension_semantics<parallel>], iteration_bounds = array<i64: 1>, scalar_prefetch = 0 : i64, scratch_operands = 0 : i64, tpu.core_type = #tpu.core_type<tc>, window_params = [{transform_indices = @transform_0, window_bounds = array<i64: 4, 8>}, {pipeline_mode = #tpu.pipeline_mode<synchronous>, transform_indices = @transform_1, window_bounds = array<i64: 32, 4>}, {pipeline_mode = #tpu.pipeline_mode<synchronous>, transform_indices = @transform_2, window_bounds = array<i64: 32, 1>}, {pipeline_mode = #tpu.pipeline_mode<synchronous>, transform_indices = @transform_3, window_bounds = array<i64: 32, 32>}, {pipeline_mode = #tpu.pipeline_mode<synchronous>, transform_indices = @transform_4, window_bounds = array<i64: 32, 1>}, {pipeline_mode = #tpu.pipeline_mode<synchronous>, transform_indices = @transform_5, window_bounds = array<i64: 64, 32>}, {pipeline_mode = #tpu.pipeline_mode<synchronous>, transform_indices = @transform_6, window_bounds = array<i64: 64, 1>}, {pipeline_mode = #tpu.pipeline_mode<synchronous>, transform_indices = @transform_7, window_bounds = array<i64: 32, 64>}, {pipeline_mode = #tpu.pipeline_mode<synchronous>, transform_indices = @transform_8, window_bounds = array<i64: 32, 1>}, {pipeline_mode = #tpu.pipeline_mode<synchronous>, transform_indices = @transform_9, window_bounds = array<i64: 2, 32>}, {pipeline_mode = #tpu.pipeline_mode<synchronous>, transform_indices = @transform_10, window_bounds = array<i64: 2, 1>}, {transform_indices = @transform_11, window_bounds = array<i64: 2, 8>}]} {
    %c0 = arith.constant 0 : index
    %c0_0 = arith.constant 0 : index
    %0 = vector.load %arg1[%c0, %c0_0] : memref<4x8xf32, #tpu.memory_space<vmem>>, vector<4x8xf32>
    %c0_1 = arith.constant 0 : index
    %c0_2 = arith.constant 0 : index
    %1 = vector.load %arg2[%c0_1, %c0_2] : memref<32x4xf32, #tpu.memory_space<vmem>>, vector<32x4xf32>
    %cst = arith.constant dense<0.000000e+00> : vector<32x8xf32>
    %2 = tpu.matmul %1, %0, %cst {dimension_numbers = #tpu.dot_dimension_numbers<[1], [0], [0], [1], [0, 0, 1, 1], [], []>} : vector<32x4xf32>, vector<4x8xf32>, vector<32x8xf32> -> vector<32x8xf32>
    %c0_3 = arith.constant 0 : index
    %c0_4 = arith.constant 0 : index
    %3 = vector.load %arg3[%c0_3, %c0_4] : memref<32x1xf32, #tpu.memory_space<vmem>>, vector<32x1xf32>
    %4 = vector.broadcast %3 : vector<32x1xf32> to vector<32x8xf32>
    %5 = arith.addf %2, %4 : vector<32x8xf32>
    %cst_5 = arith.constant 0.000000e+00 : f32
    %6 = vector.broadcast %cst_5 : f32 to vector<32x8xf32>
    %7 = arith.maximumf %5, %6 : vector<32x8xf32>
    %c0_6 = arith.constant 0 : index
    %c0_7 = arith.constant 0 : index
    %8 = vector.load %arg4[%c0_6, %c0_7] : memref<32x32xf32, #tpu.memory_space<vmem>>, vector<32x32xf32>
    %cst_8 = arith.constant dense<0.000000e+00> : vector<32x8xf32>
    %9 = tpu.matmul %8, %7, %cst_8 {dimension_numbers = #tpu.dot_dimension_numbers<[1], [0], [0], [1], [0, 0, 1, 1], [], []>} : vector<32x32xf32>, vector<32x8xf32>, vector<32x8xf32> -> vector<32x8xf32>
    %c0_9 = arith.constant 0 : index
    %c0_10 = arith.constant 0 : index
    %10 = vector.load %arg5[%c0_9, %c0_10] : memref<32x1xf32, #tpu.memory_space<vmem>>, vector<32x1xf32>
    %11 = vector.broadcast %10 : vector<32x1xf32> to vector<32x8xf32>
    %12 = arith.addf %9, %11 : vector<32x8xf32>
    %cst_11 = arith.constant 0.000000e+00 : f32
    %13 = vector.broadcast %cst_11 : f32 to vector<32x8xf32>
    %14 = arith.maximumf %12, %13 : vector<32x8xf32>
    %c0_12 = arith.constant 0 : index
    %c0_13 = arith.constant 0 : index
    %15 = vector.load %arg6[%c0_12, %c0_13] : memref<64x32xf32, #tpu.memory_space<vmem>>, vector<64x32xf32>
    %cst_14 = arith.constant dense<0.000000e+00> : vector<64x8xf32>
    %16 = tpu.matmul %15, %14, %cst_14 {dimension_numbers = #tpu.dot_dimension_numbers<[1], [0], [0], [1], [0, 0, 1, 1], [], []>} : vector<64x32xf32>, vector<32x8xf32>, vector<64x8xf32> -> vector<64x8xf32>
    %c0_15 = arith.constant 0 : index
    %c0_16 = arith.constant 0 : index
    %17 = vector.load %arg7[%c0_15, %c0_16] : memref<64x1xf32, #tpu.memory_space<vmem>>, vector<64x1xf32>
    %18 = vector.broadcast %17 : vector<64x1xf32> to vector<64x8xf32>
    %19 = arith.addf %16, %18 : vector<64x8xf32>
    %cst_17 = arith.constant 0.000000e+00 : f32
    %20 = vector.broadcast %cst_17 : f32 to vector<64x8xf32>
    %21 = arith.maximumf %19, %20 : vector<64x8xf32>
    %c0_18 = arith.constant 0 : index
    %c0_19 = arith.constant 0 : index
    %22 = vector.load %arg8[%c0_18, %c0_19] : memref<32x64xf32, #tpu.memory_space<vmem>>, vector<32x64xf32>
    %cst_20 = arith.constant dense<0.000000e+00> : vector<32x8xf32>
    %23 = tpu.matmul %22, %21, %cst_20 {dimension_numbers = #tpu.dot_dimension_numbers<[1], [0], [0], [1], [0, 0, 1, 1], [], []>} : vector<32x64xf32>, vector<64x8xf32>, vector<32x8xf32> -> vector<32x8xf32>
    %c0_21 = arith.constant 0 : index
    %c0_22 = arith.constant 0 : index
    %24 = vector.load %arg9[%c0_21, %c0_22] : memref<32x1xf32, #tpu.memory_space<vmem>>, vector<32x1xf32>
    %25 = vector.broadcast %24 : vector<32x1xf32> to vector<32x8xf32>
    %26 = arith.addf %23, %25 : vector<32x8xf32>
    %cst_23 = arith.constant 0.000000e+00 : f32
    %27 = vector.broadcast %cst_23 : f32 to vector<32x8xf32>
    %28 = arith.maximumf %26, %27 : vector<32x8xf32>
    %c0_24 = arith.constant 0 : index
    %c0_25 = arith.constant 0 : index
    %29 = vector.load %arg10[%c0_24, %c0_25] : memref<2x32xf32, #tpu.memory_space<vmem>>, vector<2x32xf32>
    %cst_26 = arith.constant dense<0.000000e+00> : vector<2x8xf32>
    %30 = tpu.matmul %29, %28, %cst_26 {dimension_numbers = #tpu.dot_dimension_numbers<[1], [0], [0], [1], [0, 0, 1, 1], [], []>} : vector<2x32xf32>, vector<32x8xf32>, vector<2x8xf32> -> vector<2x8xf32>
    %c0_27 = arith.constant 0 : index
    %c0_28 = arith.constant 0 : index
    %31 = vector.load %arg11[%c0_27, %c0_28] : memref<2x1xf32, #tpu.memory_space<vmem>>, vector<2x1xf32>
    %32 = vector.broadcast %31 : vector<2x1xf32> to vector<2x8xf32>
    %33 = arith.addf %30, %32 : vector<2x8xf32>
    %c0_29 = arith.constant 0 : index
    %c0_30 = arith.constant 0 : index
    %34 = vector.load %arg12[%c0_29, %c0_30] : memref<2x8xf32, #tpu.memory_space<vmem>>, vector<2x8xf32>
    tpu.vector_store %arg12[%c0_29, %c0_30], %33 {strides = array<i32>} : memref<2x8xf32, #tpu.memory_space<vmem>>, vector<2x8xf32>,
    return
  }
  func.func @transform_0(%arg0: i32) -> (i32, i32) {
    %c0_i32 = arith.constant 0 : i32
    %c0_i32_0 = arith.constant 0 : i32
    return %c0_i32, %arg0 : i32, i32
  }
  func.func @transform_1(%arg0: i32) -> (i32, i32) {
    %c0_i32 = arith.constant 0 : i32
    %c0_i32_0 = arith.constant 0 : i32
    %c0_i32_1 = arith.constant 0 : i32
    return %c0_i32, %c0_i32_0 : i32, i32
  }
  func.func @transform_2(%arg0: i32) -> (i32, i32) {
    %c0_i32 = arith.constant 0 : i32
    %c0_i32_0 = arith.constant 0 : i32
    %c0_i32_1 = arith.constant 0 : i32
    return %c0_i32, %c0_i32_0 : i32, i32
  }
  func.func @transform_3(%arg0: i32) -> (i32, i32) {
    %c0_i32 = arith.constant 0 : i32
    %c0_i32_0 = arith.constant 0 : i32
    %c0_i32_1 = arith.constant 0 : i32
    return %c0_i32, %c0_i32_0 : i32, i32
  }
  func.func @transform_4(%arg0: i32) -> (i32, i32) {
    %c0_i32 = arith.constant 0 : i32
    %c0_i32_0 = arith.constant 0 : i32
    %c0_i32_1 = arith.constant 0 : i32
    return %c0_i32, %c0_i32_0 : i32, i32
  }
  func.func @transform_5(%arg0: i32) -> (i32, i32) {
    %c0_i32 = arith.constant 0 : i32
    %c0_i32_0 = arith.constant 0 : i32
    %c0_i32_1 = arith.constant 0 : i32
    return %c0_i32, %c0_i32_0 : i32, i32
  }
  func.func @transform_6(%arg0: i32) -> (i32, i32) {
    %c0_i32 = arith.constant 0 : i32
    %c0_i32_0 = arith.constant 0 : i32
    %c0_i32_1 = arith.constant 0 : i32
    return %c0_i32, %c0_i32_0 : i32, i32
  }
  func.func @transform_7(%arg0: i32) -> (i32, i32) {
    %c0_i32 = arith.constant 0 : i32
    %c0_i32_0 = arith.constant 0 : i32
    %c0_i32_1 = arith.constant 0 : i32
    return %c0_i32, %c0_i32_0 : i32, i32
  }
  func.func @transform_8(%arg0: i32) -> (i32, i32) {
    %c0_i32 = arith.constant 0 : i32
    %c0_i32_0 = arith.constant 0 : i32
    %c0_i32_1 = arith.constant 0 : i32
    return %c0_i32, %c0_i32_0 : i32, i32
  }
  func.func @transform_9(%arg0: i32) -> (i32, i32) {
    %c0_i32 = arith.constant 0 : i32
    %c0_i32_0 = arith.constant 0 : i32
    %c0_i32_1 = arith.constant 0 : i32
    return %c0_i32, %c0_i32_0 : i32, i32
  }
  func.func @transform_10(%arg0: i32) -> (i32, i32) {
    %c0_i32 = arith.constant 0 : i32
    %c0_i32_0 = arith.constant 0 : i32
    %c0_i32_1 = arith.constant 0 : i32
    return %c0_i32, %c0_i32_0 : i32, i32
  }
  func.func @transform_11(%arg0: i32) -> (i32, i32) {
    %c0_i32 = arith.constant 0 : i32
    %c0_i32_0 = arith.constant 0 : i32
    return %c0_i32, %arg0 : i32, i32
  }
}

</mosaic_0001>

<llo_original>
// kernel: tpu_custom_call.1
$region0: #{tpu_custom_call.1}
  #allocation0 [shape = 'u32[]', space=smem, size = 0x4, offset = 0x4, fixed_abs, tag = 'smem constant byte address 0x4 - core index']
  #allocation1 [shape = 'u32[144,128]{1,0:T(1,128)}', space=vmem, size = 0x12000, scoped, tag = 'internal scratch']
  %s0 = inlined_call_operand.vmem [shape: f32[4,8], index: 0, kind: input, shape index: {}]
  %s1 = inlined_call_operand.vmem [shape: f32[32,4], index: 1, kind: input, shape index: {}]
  %s2 = inlined_call_operand.vmem [shape: f32[32,1], index: 2, kind: input, shape index: {}]
  %s3 = inlined_call_operand.vmem [shape: f32[32,32], index: 3, kind: input, shape index: {}]
  %s4 = inlined_call_operand.vmem [shape: f32[32,1], index: 4, kind: input, shape index: {}]
  %s5 = inlined_call_operand.vmem [shape: f32[64,32], index: 5, kind: input, shape index: {}]
  %s6 = inlined_call_operand.vmem [shape: f32[64,1], index: 6, kind: input, shape index: {}]
  %s7 = inlined_call_operand.vmem [shape: f32[32,64], index: 7, kind: input, shape index: {}]
  %s8 = inlined_call_operand.vmem [shape: f32[32,1], index: 8, kind: input, shape index: {}]
  %s9 = inlined_call_operand.vmem [shape: f32[2,32], index: 9, kind: input, shape index: {}]
  %s10 = inlined_call_operand.vmem [shape: f32[2,1], index: 10, kind: input, shape index: {}]
  %s11 = inlined_call_operand.hbm [shape: f32[2,8], index: 11, kind: output, shape index: {}]
  %s12 = sld [smem:[#allocation0]]
  $region54: #{tpu_custom_call.1} parent=0
    _
  %s14 = ssub.s32 1, %s12
  %s15 = scalar_select 0, %s14, %s12
  $region1: #{tpu_custom_call.1} parent=0
    #allocation2 [shape = 'u8[1024]{0}', space=vmem, size = 0x400, scoped, tag = 'output window, operand 0, single buffered']
    #allocation3 [shape = 's32[1]{0}', space=sflag, size = 0x4, scoped, tag = 'scoped memory for tpu_custom_call.1']
    %16 = vsyncpa [#allocation3], 0
    // Predicated region
    $region2: #{tpu_custom_call.1} parent=1 // pred_check
      _
    $region3: #{tpu_custom_call.1} parent=1 // pred_check_branch
      %18 = sbr.rel (0) target = $region5
    $region4: #{tpu_custom_call.1} parent=1 // pred_region
      _
    $region5: #{tpu_custom_call.1} parent=1 // pred_fallthru
      _
    // Predicated region
    $region6: #{tpu_custom_call.1} parent=1 // pred_check
      _
    $region7: #{tpu_custom_call.1} parent=1 // pred_check_branch
      %20 = sbr.rel (0) target = $region9
    $region8: #{tpu_custom_call.1} parent=1 // pred_region
      _
    $region9: #{tpu_custom_call.1} parent=1 // pred_fallthru
      _
    // Predicated region
    $region10: #{tpu_custom_call.1} parent=1 // pred_check
      _
    $region11: #{tpu_custom_call.1} parent=1 // pred_check_branch
      %22 = sbr.rel (0) target = $region13
    $region12: #{tpu_custom_call.1} parent=1 // pred_region
      _
    $region13: #{tpu_custom_call.1} parent=1 // pred_fallthru
      _
    // Predicated region
    $region14: #{tpu_custom_call.1} parent=1 // pred_check
      _
    $region15: #{tpu_custom_call.1} parent=1 // pred_check_branch
      %24 = sbr.rel (0) target = $region17
    $region16: #{tpu_custom_call.1} parent=1 // pred_region
      _
    $region17: #{tpu_custom_call.1} parent=1 // pred_fallthru
      _
    // Predicated region
    $region18: #{tpu_custom_call.1} parent=1 // pred_check
      _
    $region19: #{tpu_custom_call.1} parent=1 // pred_check_branch
      %26 = sbr.rel (0) target = $region21
    $region20: #{tpu_custom_call.1} parent=1 // pred_region
      _
    $region21: #{tpu_custom_call.1} parent=1 // pred_fallthru
      _
    // Predicated region
    $region22: #{tpu_custom_call.1} parent=1 // pred_check
      _
    $region23: #{tpu_custom_call.1} parent=1 // pred_check_branch
      %28 = sbr.rel (0) target = $region25
    $region24: #{tpu_custom_call.1} parent=1 // pred_region
      _
    $region25: #{tpu_custom_call.1} parent=1 // pred_fallthru
      _
    // Predicated region
    $region26: #{tpu_custom_call.1} parent=1 // pred_check
      _
    $region27: #{tpu_custom_call.1} parent=1 // pred_check_branch
      %30 = sbr.rel (0) target = $region29
    $region28: #{tpu_custom_call.1} parent=1 // pred_region
      _
    $region29: #{tpu_custom_call.1} parent=1 // pred_fallthru
      _
    // Predicated region
    $region30: #{tpu_custom_call.1} parent=1 // pred_check
      _
    $region31: #{tpu_custom_call.1} parent=1 // pred_check_branch
      %32 = sbr.rel (0) target = $region33
    $region32: #{tpu_custom_call.1} parent=1 // pred_region
      _
    $region33: #{tpu_custom_call.1} parent=1 // pred_fallthru
      _
    // Predicated region
    $region34: #{tpu_custom_call.1} parent=1 // pred_check
      _
    $region35: #{tpu_custom_call.1} parent=1 // pred_check_branch
      %34 = sbr.rel (0) target = $region37
    $region36: #{tpu_custom_call.1} parent=1 // pred_region
      _
    $region37: #{tpu_custom_call.1} parent=1 // pred_fallthru
      _
    // Predicated region
    $region38: #{tpu_custom_call.1} parent=1 // pred_check
      _
    $region39: #{tpu_custom_call.1} parent=1 // pred_check_branch
      %36 = sbr.rel (0) target = $region41
    $region40: #{tpu_custom_call.1} parent=1 // pred_region
      _
    $region41: #{tpu_custom_call.1} parent=1 // pred_fallthru
      _
    // Predicated region
    $region42: #{tpu_custom_call.1} parent=1 // pred_check
      _
    $region43: #{tpu_custom_call.1} parent=1 // pred_check_branch
      %38 = sbr.rel (0) target = $region45
    $region44: #{tpu_custom_call.1} parent=1 // pred_region
      _
    $region45: #{tpu_custom_call.1} parent=1 // pred_fallthru
      _
    %v39 = vld [vmem:[%s0] sm:$0xf]
    %v40 = vld [vmem:[%s1] sm:$0xff]
    %v41 = vld [vmem:[%s1 + $0x8] sm:$0xff]
    %v42 = vld [vmem:[%s1 + $0x10] sm:$0xff]
    %v43 = vld [vmem:[%s1 + $0x18] sm:$0xff]
    %v44 = vld [vmem:[%s2] sm:$0xff]
    %v45 = vld [vmem:[%s2 + $0x8] sm:$0xff]
    %v46 = vld [vmem:[%s2 + $0x10] sm:$0xff]
    %v47 = vld [vmem:[%s2 + $0x18] sm:$0xff]
    %49 = vset.pattern.permute.xlu0 0
    %50 = vperm.xlu0 %49, %v44
    %v51 = vpop.permute.xlu0 %50
    %54 = vset.pattern.permute.xlu0 0
    %55 = vperm.xlu0 %54, %v45
    %v56 = vpop.permute.xlu0 %55
    %59 = vset.pattern.permute.xlu0 0
    %60 = vperm.xlu0 %59, %v46
    %v61 = vpop.permute.xlu0 %60
    %64 = vset.pattern.permute.xlu0 0
    %65 = vperm.xlu0 %64, %v47
    %v66 = vpop.permute.xlu0 %65
    %vm68 = vcmask 31744
    %v70 = vsel %vm68, %v40, 0
    %v73 = vsel %vm68, %v41, 0
    %v76 = vsel %vm68, %v42, 0
    %v79 = vsel %vm68, %v43, 0
    %vm81 = vcmask 1043456
    %v83 = vsel %vm81, %v39, 0
    %85 = vmatprep.subr.mxu0 0.0
    %86 = vmatpush1.msra.mxu0 0.0
    %87 = vmatprep.subr.mxu0 0.0
    %88 = vmatpush1.msra.mxu0 0.0
    %89 = vmatprep.subr.mxu0 0.0
    %90 = vmatpush1.msra.mxu0 0.0
    %91 = vmatprep.subr.mxu0 0.0
    %92 = vmatpush1.msra.mxu0 0.0
    %93 = vmatprep.subr.mxu0 0.0
    %94 = vmatpush1.msra.mxu0 0.0
    %95 = vmatprep.subr.mxu0 0.0
    %96 = vmatpush1.msra.mxu0 0.0
    %97 = vmatprep.subr.mxu0 0.0
    %98 = vmatpush1.msra.mxu0 0.0
    %99 = vmatprep.subr.mxu0 0.0
    %100 = vmatpush1.msra.mxu0 0.0
    %101 = vmatprep.subr.mxu0 0.0
    %102 = vmatpush1.msra.mxu0 0.0
    %103 = vmatprep.subr.mxu0 0.0
    %104 = vmatpush1.msra.mxu0 0.0
    %105 = vmatprep.subr.mxu0 0.0
    %106 = vmatpush1.msra.mxu0 0.0
    %107 = vmatprep.subr.mxu0 0.0
    %108 = vmatpush1.msra.mxu0 0.0
    %109 = vmatprep.subr.mxu0 0.0
    %110 = vmatpush1.msra.mxu0 0.0
    %111 = vmatprep.subr.mxu0 0.0
    %112 = vmatpush1.msra.mxu0 0.0
    %113 = vmatprep.subr.mxu0 0.0
    %114 = vmatpush1.msra.mxu0 0.0
    %115 = vmatprep.subr.mxu0 0.0
    %116 = vmatpush1.msra.mxu0 %v83
    %117 = vmatprep.subr.mxu0 0.0
    %118 = vmatpush2.msra.mxu0 0.0
    %119 = vmatprep.subr.mxu0 0.0
    %120 = vmatpush2.msra.mxu0 0.0
    %121 = vmatprep.subr.mxu0 0.0
    %122 = vmatpush2.msra.mxu0 0.0
    %123 = vmatprep.subr.mxu0 0.0
    %124 = vmatpush2.msra.mxu0 0.0
    %125 = vmatprep.subr.mxu0 0.0
    %126 = vmatpush2.msra.mxu0 0.0
    %127 = vmatprep.subr.mxu0 0.0
    %128 = vmatpush2.msra.mxu0 0.0
    %129 = vmatprep.subr.mxu0 0.0
    %130 = vmatpush2.msra.mxu0 0.0
    %131 = vmatprep.subr.mxu0 0.0
    %132 = vmatpush2.msra.mxu0 0.0
    %133 = vmatprep.subr.mxu0 0.0
    %134 = vmatpush2.msra.mxu0 0.0
    %135 = vmatprep.subr.mxu0 0.0
    %136 = vmatpush2.msra.mxu0 0.0
    %137 = vmatprep.subr.mxu0 0.0
    %138 = vmatpush2.msra.mxu0 0.0
    %139 = vmatprep.subr.mxu0 0.0
    %140 = vmatpush2.msra.mxu0 0.0
    %141 = vmatprep.subr.mxu0 0.0
    %142 = vmatpush2.msra.mxu0 0.0
    %143 = vmatprep.subr.mxu0 0.0
    %144 = vmatpush2.msra.mxu0 0.0
    %145 = vmatprep.subr.mxu0 0.0
    %146 = vmatpush2.msra.mxu0 0.0
    %147 = vmatprep.subr.mxu0 0.0
    %148 = vmatpush2.msra.mxu0 0.0
    %149 = vmatprep.mubr.f32.mxu0 0.0
    %150 = vmatmul.mubr.f32.gmra.mxu0 %v70
    %v151 = vpop.f32.mrf.mxu0
    %v152 = vadd.f32 %v51, %v151
    %v153 = vpop.f32.mrf.mxu0
    %154 = vmatprep.mubr.f32.mxu0 0.0
    %155 = vmatmul.mubr.f32.gmra.mxu0 %v73
    %v156 = vpop.f32.mrf.mxu0
    %v157 = vadd.f32 %v56, %v156
    %v158 = vpop.f32.mrf.mxu0
    %159 = vmatprep.mubr.f32.mxu0 0.0
    %160 = vmatmul.mubr.f32.gmra.mxu0 %v76
    %v161 = vpop.f32.mrf.mxu0
    %v162 = vadd.f32 %v61, %v161
    %v163 = vpop.f32.mrf.mxu0
    %164 = vmatprep.mubr.f32.mxu0 0.0
    %165 = vmatmul.mubr.f32.gmra.mxu0 %v79
    %v166 = vpop.f32.mrf.mxu0
    %v167 = vadd.f32 %v66, %v166
    %v168 = vpop.f32.mrf.mxu0
    %169 = vdwg.mxu0
    %v170 = vmax.f32 %v152, 0.0
    %v171 = vmax.f32 %v157, 0.0
    %v172 = vmax.f32 %v162, 0.0
    %v173 = vmax.f32 %v167, 0.0
    %v174 = vld [vmem:[%s3] sm:$0xff]
    %v175 = vld [vmem:[%s3 + $0x8] sm:$0xff]
    %v176 = vld [vmem:[%s3 + $0x10] sm:$0xff]
    %v177 = vld [vmem:[%s3 + $0x18] sm:$0xff]
    %v178 = vld [vmem:[%s4] sm:$0xff]
    %v179 = vld [vmem:[%s4 + $0x8] sm:$0xff]
    %v180 = vld [vmem:[%s4 + $0x10] sm:$0xff]
    %v181 = vld [vmem:[%s4 + $0x18] sm:$0xff]
    %183 = vset.pattern.permute.xlu0 0
    %184 = vperm.xlu0 %183, %v178
    %v185 = vpop.permute.xlu0 %184
    %188 = vset.pattern.permute.xlu0 0
    %189 = vperm.xlu0 %188, %v179
    %v190 = vpop.permute.xlu0 %189
    %193 = vset.pattern.permute.xlu0 0
    %194 = vperm.xlu0 %193, %v180
    %v195 = vpop.permute.xlu0 %194
    %198 = vset.pattern.permute.xlu0 0
    %199 = vperm.xlu0 %198, %v181
    %v200 = vpop.permute.xlu0 %199
    %vm202 = vcmask 261120
    %v204 = vsel %vm202, %v174, 0
    %v207 = vsel %vm202, %v175, 0
    %v210 = vsel %vm202, %v176, 0
    %v213 = vsel %vm202, %v177, 0
    %215 = vmatprep.subr.mxu0 0.0
    %216 = vmatpush1.msra.mxu0 0.0
    %217 = vmatprep.subr.mxu0 0.0
    %218 = vmatpush1.msra.mxu0 0.0
    %219 = vmatprep.subr.mxu0 0.0
    %220 = vmatpush1.msra.mxu0 0.0
    %221 = vmatprep.subr.mxu0 0.0
    %222 = vmatpush1.msra.mxu0 0.0
    %223 = vmatprep.subr.mxu0 0.0
    %224 = vmatpush1.msra.mxu0 0.0
    %225 = vmatprep.subr.mxu0 0.0
    %226 = vmatpush1.msra.mxu0 0.0
    %227 = vmatprep.subr.mxu0 0.0
    %228 = vmatpush1.msra.mxu0 0.0
    %229 = vmatprep.subr.mxu0 0.0
    %230 = vmatpush1.msra.mxu0 0.0
    %231 = vmatprep.subr.mxu0 0.0
    %232 = vmatpush1.msra.mxu0 0.0
    %233 = vmatprep.subr.mxu0 0.0
    %234 = vmatpush1.msra.mxu0 0.0
    %235 = vmatprep.subr.mxu0 0.0
    %236 = vmatpush1.msra.mxu0 0.0
    %237 = vmatprep.subr.mxu0 0.0
    %238 = vmatpush1.msra.mxu0 0.0
    %239 = vmatprep.subr.mxu0 0.0
    %240 = vmatpush1.msra.mxu0 %v173
    %241 = vmatprep.subr.mxu0 0.0
    %242 = vmatpush1.msra.mxu0 %v172
    %243 = vmatprep.subr.mxu0 0.0
    %244 = vmatpush1.msra.mxu0 %v171
    %245 = vmatprep.subr.mxu0 0.0
    %246 = vmatpush1.msra.mxu0 %v170
    %247 = vmatprep.subr.mxu0 0.0
    %248 = vmatpush2.msra.mxu0 0.0
    %249 = vmatprep.subr.mxu0 0.0
    %250 = vmatpush2.msra.mxu0 0.0
    %251 = vmatprep.subr.mxu0 0.0
    %252 = vmatpush2.msra.mxu0 0.0
    %253 = vmatprep.subr.mxu0 0.0
    %254 = vmatpush2.msra.mxu0 0.0
    %255 = vmatprep.subr.mxu0 0.0
    %256 = vmatpush2.msra.mxu0 0.0
    %257 = vmatprep.subr.mxu0 0.0
    %258 = vmatpush2.msra.mxu0 0.0
    %259 = vmatprep.subr.mxu0 0.0
    %260 = vmatpush2.msra.mxu0 0.0
    %261 = vmatprep.subr.mxu0 0.0
    %262 = vmatpush2.msra.mxu0 0.0
    %263 = vmatprep.subr.mxu0 0.0
    %264 = vmatpush2.msra.mxu0 0.0
    %265 = vmatprep.subr.mxu0 0.0
    %266 = vmatpush2.msra.mxu0 0.0
    %267 = vmatprep.subr.mxu0 0.0
    %268 = vmatpush2.msra.mxu0 0.0
    %269 = vmatprep.subr.mxu0 0.0
    %270 = vmatpush2.msra.mxu0 0.0
    %271 = vmatprep.subr.mxu0 0.0
    %272 = vmatpush2.msra.mxu0 0.0
    %273 = vmatprep.subr.mxu0 0.0
    %274 = vmatpush2.msra.mxu0 0.0
    %275 = vmatprep.subr.mxu0 0.0
    %276 = vmatpush2.msra.mxu0 0.0
    %277 = vmatprep.subr.mxu0 0.0
    %278 = vmatpush2.msra.mxu0 0.0
    %279 = vmatprep.mubr.f32.mxu0 0.0
    %280 = vmatmul.mubr.f32.gmra.mxu0 %v204
    %v281 = vpop.f32.mrf.mxu0
    %v282 = vadd.f32 %v185, %v281
    %v283 = vpop.f32.mrf.mxu0
    %284 = vmatprep.mubr.f32.mxu0 0.0
    %285 = vmatmul.mubr.f32.gmra.mxu0 %v207
    %v286 = vpop.f32.mrf.mxu0
    %v287 = vadd.f32 %v190, %v286
    %v288 = vpop.f32.mrf.mxu0
    %289 = vmatprep.mubr.f32.mxu0 0.0
    %290 = vmatmul.mubr.f32.gmra.mxu0 %v210
    %v291 = vpop.f32.mrf.mxu0
    %v292 = vadd.f32 %v195, %v291
    %v293 = vpop.f32.mrf.mxu0
    %294 = vmatprep.mubr.f32.mxu0 0.0
    %295 = vmatmul.mubr.f32.gmra.mxu0 %v213
    %v296 = vpop.f32.mrf.mxu0
    %v297 = vadd.f32 %v200, %v296
    %v298 = vpop.f32.mrf.mxu0
    %299 = vdwg.mxu0
    %v300 = vmax.f32 %v282, 0.0
    %v301 = vmax.f32 %v287, 0.0
    %v302 = vmax.f32 %v292, 0.0
    %v303 = vmax.f32 %v297, 0.0
    %v304 = vld [vmem:[%s5] sm:$0xff]
    %v305 = vld [vmem:[%s5 + $0x8] sm:$0xff]
    %v306 = vld [vmem:[%s5 + $0x10] sm:$0xff]
    %v307 = vld [vmem:[%s5 + $0x18] sm:$0xff]
    %v308 = vld [vmem:[%s5 + $0x20] sm:$0xff]
    %v309 = vld [vmem:[%s5 + $0x28] sm:$0xff]
    %v310 = vld [vmem:[%s5 + $0x30] sm:$0xff]
    %v311 = vld [vmem:[%s5 + $0x38] sm:$0xff]
    %v312 = vld [vmem:[%s6] sm:$0xff]
    %v313 = vld [vmem:[%s6 + $0x8] sm:$0xff]
    %v314 = vld [vmem:[%s6 + $0x10] sm:$0xff]
    %v315 = vld [vmem:[%s6 + $0x18] sm:$0xff]
    %v316 = vld [vmem:[%s6 + $0x20] sm:$0xff]
    %v317 = vld [vmem:[%s6 + $0x28] sm:$0xff]
    %v318 = vld [vmem:[%s6 + $0x30] sm:$0xff]
    %v319 = vld [vmem:[%s6 + $0x38] sm:$0xff]
    %321 = vset.pattern.permute.xlu0 0
    %322 = vperm.xlu0 %321, %v312
    %v323 = vpop.permute.xlu0 %322
    %326 = vset.pattern.permute.xlu0 0
    %327 = vperm.xlu0 %326, %v313
    %v328 = vpop.permute.xlu0 %327
    %331 = vset.pattern.permute.xlu0 0
    %332 = vperm.xlu0 %331, %v314
    %v333 = vpop.permute.xlu0 %332
    %336 = vset.pattern.permute.xlu0 0
    %337 = vperm.xlu0 %336, %v315
    %v338 = vpop.permute.xlu0 %337
    %341 = vset.pattern.permute.xlu0 0
    %342 = vperm.xlu0 %341, %v316
    %v343 = vpop.permute.xlu0 %342
    %346 = vset.pattern.permute.xlu0 0
    %347 = vperm.xlu0 %346, %v317
    %v348 = vpop.permute.xlu0 %347
    %351 = vset.pattern.permute.xlu0 0
    %352 = vperm.xlu0 %351, %v318
    %v353 = vpop.permute.xlu0 %352
    %356 = vset.pattern.permute.xlu0 0
    %357 = vperm.xlu0 %356, %v319
    %v358 = vpop.permute.xlu0 %357
    %v361 = vsel %vm202, %v304, 0
    %v364 = vsel %vm202, %v305, 0
    %v367 = vsel %vm202, %v306, 0
    %v370 = vsel %vm202, %v307, 0
    %v373 = vsel %vm202, %v308, 0
    %v376 = vsel %vm202, %v309, 0
    %v379 = vsel %vm202, %v310, 0
    %v382 = vsel %vm202, %v311, 0
    %384 = vmatprep.subr.mxu0 0.0
    %385 = vmatpush1.msra.mxu0 0.0
    %386 = vmatprep.subr.mxu0 0.0
    %387 = vmatpush1.msra.mxu0 0.0
    %388 = vmatprep.subr.mxu0 0.0
    %389 = vmatpush1.msra.mxu0 0.0
    %390 = vmatprep.subr.mxu0 0.0
    %391 = vmatpush1.msra.mxu0 0.0
    %392 = vmatprep.subr.mxu0 0.0
    %393 = vmatpush1.msra.mxu0 0.0
    %394 = vmatprep.subr.mxu0 0.0
    %395 = vmatpush1.msra.mxu0 0.0
    %396 = vmatprep.subr.mxu0 0.0
    %397 = vmatpush1.msra.mxu0 0.0
    %398 = vmatprep.subr.mxu0 0.0
    %399 = vmatpush1.msra.mxu0 0.0
    %400 = vmatprep.subr.mxu0 0.0
    %401 = vmatpush1.msra.mxu0 0.0
    %402 = vmatprep.subr.mxu0 0.0
    %403 = vmatpush1.msra.mxu0 0.0
    %404 = vmatprep.subr.mxu0 0.0
    %405 = vmatpush1.msra.mxu0 0.0
    %406 = vmatprep.subr.mxu0 0.0
    %407 = vmatpush1.msra.mxu0 0.0
    %408 = vmatprep.subr.mxu0 0.0
    %409 = vmatpush1.msra.mxu0 %v303
    %410 = vmatprep.subr.mxu0 0.0
    %411 = vmatpush1.msra.mxu0 %v302
    %412 = vmatprep.subr.mxu0 0.0
    %413 = vmatpush1.msra.mxu0 %v301
    %414 = vmatprep.subr.mxu0 0.0
    %415 = vmatpush1.msra.mxu0 %v300
    %416 = vmatprep.subr.mxu0 0.0
    %417 = vmatpush2.msra.mxu0 0.0
    %418 = vmatprep.subr.mxu0 0.0
    %419 = vmatpush2.msra.mxu0 0.0
    %420 = vmatprep.subr.mxu0 0.0
    %421 = vmatpush2.msra.mxu0 0.0
    %422 = vmatprep.subr.mxu0 0.0
    %423 = vmatpush2.msra.mxu0 0.0
    %424 = vmatprep.subr.mxu0 0.0
    %425 = vmatpush2.msra.mxu0 0.0
    %426 = vmatprep.subr.mxu0 0.0
    %427 = vmatpush2.msra.mxu0 0.0
    %428 = vmatprep.subr.mxu0 0.0
    %429 = vmatpush2.msra.mxu0 0.0
    %430 = vmatprep.subr.mxu0 0.0
    %431 = vmatpush2.msra.mxu0 0.0
    %432 = vmatprep.subr.mxu0 0.0
    %433 = vmatpush2.msra.mxu0 0.0
    %434 = vmatprep.subr.mxu0 0.0
    %435 = vmatpush2.msra.mxu0 0.0
    %436 = vmatprep.subr.mxu0 0.0
    %437 = vmatpush2.msra.mxu0 0.0
    %438 = vmatprep.subr.mxu0 0.0
    %439 = vmatpush2.msra.mxu0 0.0
    %440 = vmatprep.subr.mxu0 0.0
    %441 = vmatpush2.msra.mxu0 0.0
    %442 = vmatprep.subr.mxu0 0.0
    %443 = vmatpush2.msra.mxu0 0.0
    %444 = vmatprep.subr.mxu0 0.0
    %445 = vmatpush2.msra.mxu0 0.0
    %446 = vmatprep.subr.mxu0 0.0
    %447 = vmatpush2.msra.mxu0 0.0
    %448 = vmatprep.mubr.f32.mxu0 0.0
    %449 = vmatmul.mubr.f32.gmra.mxu0 %v361
    %v450 = vpop.f32.mrf.mxu0
    %v451 = vadd.f32 %v323, %v450
    %v452 = vpop.f32.mrf.mxu0
    %453 = vmatprep.mubr.f32.mxu0 0.0
    %454 = vmatmul.mubr.f32.gmra.mxu0 %v364
    %v455 = vpop.f32.mrf.mxu0
    %v456 = vadd.f32 %v328, %v455
    %v457 = vpop.f32.mrf.mxu0
    %458 = vmatprep.mubr.f32.mxu0 0.0
    %459 = vmatmul.mubr.f32.gmra.mxu0 %v367
    %v460 = vpop.f32.mrf.mxu0
    %v461 = vadd.f32 %v333, %v460
    %v462 = vpop.f32.mrf.mxu0
    %463 = vmatprep.mubr.f32.mxu0 0.0
    %464 = vmatmul.mubr.f32.gmra.mxu0 %v370
    %v465 = vpop.f32.mrf.mxu0
    %v466 = vadd.f32 %v338, %v465
    %v467 = vpop.f32.mrf.mxu0
    %468 = vmatprep.mubr.f32.mxu0 0.0
    %469 = vmatmul.mubr.f32.gmra.mxu0 %v373
    %v470 = vpop.f32.mrf.mxu0
    %v471 = vadd.f32 %v343, %v470
    %v472 = vpop.f32.mrf.mxu0
    %473 = vmatprep.mubr.f32.mxu0 0.0
    %474 = vmatmul.mubr.f32.gmra.mxu0 %v376
    %v475 = vpop.f32.mrf.mxu0
    %v476 = vadd.f32 %v348, %v475
    %v477 = vpop.f32.mrf.mxu0
    %478 = vmatprep.mubr.f32.mxu0 0.0
    %479 = vmatmul.mubr.f32.gmra.mxu0 %v379
    %v480 = vpop.f32.mrf.mxu0
    %v481 = vadd.f32 %v353, %v480
    %v482 = vpop.f32.mrf.mxu0
    %483 = vmatprep.mubr.f32.mxu0 0.0
    %484 = vmatmul.mubr.f32.gmra.mxu0 %v382
    %v485 = vpop.f32.mrf.mxu0
    %v486 = vadd.f32 %v358, %v485
    %v487 = vpop.f32.mrf.mxu0
    %488 = vdwg.mxu0
    %v489 = vmax.f32 %v451, 0.0
    %v490 = vmax.f32 %v456, 0.0
    %v491 = vmax.f32 %v461, 0.0
    %v492 = vmax.f32 %v466, 0.0
    %v493 = vmax.f32 %v471, 0.0
    %v494 = vmax.f32 %v476, 0.0
    %v495 = vmax.f32 %v481, 0.0
    %v496 = vmax.f32 %v486, 0.0
    %v497 = vld [vmem:[%s7] sm:$0xff]
    %v498 = vld [vmem:[%s7 + $0x8] sm:$0xff]
    %v499 = vld [vmem:[%s7 + $0x10] sm:$0xff]
    %v500 = vld [vmem:[%s7 + $0x18] sm:$0xff]
    %v501 = vld [vmem:[%s8] sm:$0xff]
    %v502 = vld [vmem:[%s8 + $0x8] sm:$0xff]
    %v503 = vld [vmem:[%s8 + $0x10] sm:$0xff]
    %v504 = vld [vmem:[%s8 + $0x18] sm:$0xff]
    %506 = vset.pattern.permute.xlu0 0
    %507 = vperm.xlu0 %506, %v501
    %v508 = vpop.permute.xlu0 %507
    %511 = vset.pattern.permute.xlu0 0
    %512 = vperm.xlu0 %511, %v502
    %v513 = vpop.permute.xlu0 %512
    %516 = vset.pattern.permute.xlu0 0
    %517 = vperm.xlu0 %516, %v503
    %v518 = vpop.permute.xlu0 %517
    %521 = vset.pattern.permute.xlu0 0
    %522 = vperm.xlu0 %521, %v504
    %v523 = vpop.permute.xlu0 %522
    %vm525 = vcmask 523264
    %v527 = vsel %vm525, %v497, 0
    %v530 = vsel %vm525, %v498, 0
    %v533 = vsel %vm525, %v499, 0
    %v536 = vsel %vm525, %v500, 0
    %538 = vmatprep.subr.mxu0 0.0
    %539 = vmatpush1.msra.mxu0 0.0
    %540 = vmatprep.subr.mxu0 0.0
    %541 = vmatpush1.msra.mxu0 0.0
    %542 = vmatprep.subr.mxu0 0.0
    %543 = vmatpush1.msra.mxu0 0.0
    %544 = vmatprep.subr.mxu0 0.0
    %545 = vmatpush1.msra.mxu0 0.0
    %546 = vmatprep.subr.mxu0 0.0
    %547 = vmatpush1.msra.mxu0 0.0
    %548 = vmatprep.subr.mxu0 0.0
    %549 = vmatpush1.msra.mxu0 0.0
    %550 = vmatprep.subr.mxu0 0.0
    %551 = vmatpush1.msra.mxu0 0.0
    %552 = vmatprep.subr.mxu0 0.0
    %553 = vmatpush1.msra.mxu0 0.0
    %554 = vmatprep.subr.mxu0 0.0
    %555 = vmatpush1.msra.mxu0 %v496
    %556 = vmatprep.subr.mxu0 0.0
    %557 = vmatpush1.msra.mxu0 %v495
    %558 = vmatprep.subr.mxu0 0.0
    %559 = vmatpush1.msra.mxu0 %v494
    %560 = vmatprep.subr.mxu0 0.0
    %561 = vmatpush1.msra.mxu0 %v493
    %562 = vmatprep.subr.mxu0 0.0
    %563 = vmatpush1.msra.mxu0 %v492
    %564 = vmatprep.subr.mxu0 0.0
    %565 = vmatpush1.msra.mxu0 %v491
    %566 = vmatprep.subr.mxu0 0.0
    %567 = vmatpush1.msra.mxu0 %v490
    %568 = vmatprep.subr.mxu0 0.0
    %569 = vmatpush1.msra.mxu0 %v489
    %570 = vmatprep.subr.mxu0 0.0
    %571 = vmatpush2.msra.mxu0 0.0
    %572 = vmatprep.subr.mxu0 0.0
    %573 = vmatpush2.msra.mxu0 0.0
    %574 = vmatprep.subr.mxu0 0.0
    %575 = vmatpush2.msra.mxu0 0.0
    %576 = vmatprep.subr.mxu0 0.0
    %577 = vmatpush2.msra.mxu0 0.0
    %578 = vmatprep.subr.mxu0 0.0
    %579 = vmatpush2.msra.mxu0 0.0
    %580 = vmatprep.subr.mxu0 0.0
    %581 = vmatpush2.msra.mxu0 0.0
    %582 = vmatprep.subr.mxu0 0.0
    %583 = vmatpush2.msra.mxu0 0.0
    %584 = vmatprep.subr.mxu0 0.0
    %585 = vmatpush2.msra.mxu0 0.0
    %586 = vmatprep.subr.mxu0 0.0
    %587 = vmatpush2.msra.mxu0 0.0
    %588 = vmatprep.subr.mxu0 0.0
    %589 = vmatpush2.msra.mxu0 0.0
    %590 = vmatprep.subr.mxu0 0.0
    %591 = vmatpush2.msra.mxu0 0.0
    %592 = vmatprep.subr.mxu0 0.0
    %593 = vmatpush2.msra.mxu0 0.0
    %594 = vmatprep.subr.mxu0 0.0
    %595 = vmatpush2.msra.mxu0 0.0
    %596 = vmatprep.subr.mxu0 0.0
    %597 = vmatpush2.msra.mxu0 0.0
    %598 = vmatprep.subr.mxu0 0.0
    %599 = vmatpush2.msra.mxu0 0.0
    %600 = vmatprep.subr.mxu0 0.0
    %601 = vmatpush2.msra.mxu0 0.0
    %602 = vmatprep.mubr.f32.mxu0 0.0
    %603 = vmatmul.mubr.f32.gmra.mxu0 %v527
    %v604 = vpop.f32.mrf.mxu0
    %v605 = vadd.f32 %v508, %v604
    %v606 = vpop.f32.mrf.mxu0
    %607 = vmatprep.mubr.f32.mxu0 0.0
    %608 = vmatmul.mubr.f32.gmra.mxu0 %v530
    %v609 = vpop.f32.mrf.mxu0
    %v610 = vadd.f32 %v513, %v609
    %v611 = vpop.f32.mrf.mxu0
    %612 = vmatprep.mubr.f32.mxu0 0.0
    %613 = vmatmul.mubr.f32.gmra.mxu0 %v533
    %v614 = vpop.f32.mrf.mxu0
    %v615 = vadd.f32 %v518, %v614
    %v616 = vpop.f32.mrf.mxu0
    %617 = vmatprep.mubr.f32.mxu0 0.0
    %618 = vmatmul.mubr.f32.gmra.mxu0 %v536
    %v619 = vpop.f32.mrf.mxu0
    %v620 = vadd.f32 %v523, %v619
    %v621 = vpop.f32.mrf.mxu0
    %622 = vdwg.mxu0
    %v623 = vmax.f32 %v605, 0.0
    %v624 = vmax.f32 %v610, 0.0
    %v625 = vmax.f32 %v615, 0.0
    %v626 = vmax.f32 %v620, 0.0
    %v627 = vld [vmem:[%s9] sm:$0x3]
    %v628 = vld [vmem:[%s10] sm:$0x3]
    %630 = vset.pattern.permute.xlu0 0
    %631 = vperm.xlu0 %630, %v628
    %v632 = vpop.permute.xlu0 %631
    %v635 = vsel %vm202, %v627, 0
    %637 = vmatprep.subr.mxu0 0.0
    %638 = vmatpush1.msra.mxu0 0.0
    %639 = vmatprep.subr.mxu0 0.0
    %640 = vmatpush1.msra.mxu0 0.0
    %641 = vmatprep.subr.mxu0 0.0
    %642 = vmatpush1.msra.mxu0 0.0
    %643 = vmatprep.subr.mxu0 0.0
    %644 = vmatpush1.msra.mxu0 0.0
    %645 = vmatprep.subr.mxu0 0.0
    %646 = vmatpush1.msra.mxu0 0.0
    %647 = vmatprep.subr.mxu0 0.0
    %648 = vmatpush1.msra.mxu0 0.0
    %649 = vmatprep.subr.mxu0 0.0
    %650 = vmatpush1.msra.mxu0 0.0
    %651 = vmatprep.subr.mxu0 0.0
    %652 = vmatpush1.msra.mxu0 0.0
    %653 = vmatprep.subr.mxu0 0.0
    %654 = vmatpush1.msra.mxu0 0.0
    %655 = vmatprep.subr.mxu0 0.0
    %656 = vmatpush1.msra.mxu0 0.0
    %657 = vmatprep.subr.mxu0 0.0
    %658 = vmatpush1.msra.mxu0 0.0
    %659 = vmatprep.subr.mxu0 0.0
    %660 = vmatpush1.msra.mxu0 0.0
    %661 = vmatprep.subr.mxu0 0.0
    %662 = vmatpush1.msra.mxu0 %v626
    %663 = vmatprep.subr.mxu0 0.0
    %664 = vmatpush1.msra.mxu0 %v625
    %665 = vmatprep.subr.mxu0 0.0
    %666 = vmatpush1.msra.mxu0 %v624
    %667 = vmatprep.subr.mxu0 0.0
    %668 = vmatpush1.msra.mxu0 %v623
    %669 = vmatprep.subr.mxu0 0.0
    %670 = vmatpush2.msra.mxu0 0.0
    %671 = vmatprep.subr.mxu0 0.0
    %672 = vmatpush2.msra.mxu0 0.0
    %673 = vmatprep.subr.mxu0 0.0
    %674 = vmatpush2.msra.mxu0 0.0
    %675 = vmatprep.subr.mxu0 0.0
    %676 = vmatpush2.msra.mxu0 0.0
    %677 = vmatprep.subr.mxu0 0.0
    %678 = vmatpush2.msra.mxu0 0.0
    %679 = vmatprep.subr.mxu0 0.0
    %680 = vmatpush2.msra.mxu0 0.0
    %681 = vmatprep.subr.mxu0 0.0
    %682 = vmatpush2.msra.mxu0 0.0
    %683 = vmatprep.subr.mxu0 0.0
    %684 = vmatpush2.msra.mxu0 0.0
    %685 = vmatprep.subr.mxu0 0.0
    %686 = vmatpush2.msra.mxu0 0.0
    %687 = vmatprep.subr.mxu0 0.0
    %688 = vmatpush2.msra.mxu0 0.0
    %689 = vmatprep.subr.mxu0 0.0
    %690 = vmatpush2.msra.mxu0 0.0
    %691 = vmatprep.subr.mxu0 0.0
    %692 = vmatpush2.msra.mxu0 0.0
    %693 = vmatprep.subr.mxu0 0.0
    %694 = vmatpush2.msra.mxu0 0.0
    %695 = vmatprep.subr.mxu0 0.0
    %696 = vmatpush2.msra.mxu0 0.0
    %697 = vmatprep.subr.mxu0 0.0
    %698 = vmatpush2.msra.mxu0 0.0
    %699 = vmatprep.subr.mxu0 0.0
    %700 = vmatpush2.msra.mxu0 0.0
    %701 = vmatprep.mubr.f32.mxu0 0.0
    %702 = vmatmul.mubr.f32.gmra.mxu0 %v635
    %v703 = vpop.f32.mrf.mxu0
    %v704 = vadd.f32 %v632, %v703
    %v705 = vpop.f32.mrf.mxu0
    %706 = vdwg.mxu0
    %vm707 = vcmask 58368
    %708 = vst.msk [vmem:[#allocation2] sm:$0x3] %vm707, %v704
    // Predicated region
    $region46: #{tpu_custom_call.1} parent=1 // pred_check
      _
    $region47: #{tpu_custom_call.1} parent=1 // pred_check_branch
      %710 = sbr.rel (0) target = $region49
    $region48: #{tpu_custom_call.1} parent=1 // pred_region
      %s712 = ssub.s32 32, 32
      %713 = vsyncadd [#allocation3], %s712
      %s715 = sshll.u32 [#allocation2], 4
      %s716 = int_to_ptr.vmem [resolvable:$true] %s715
      %718 = dma.vmem_to_hbm [thread:$0]  %s716, 32, %s11, [#allocation3]
    $region49: #{tpu_custom_call.1} parent=1 // pred_fallthru
      _
    // Predicated region
    $region50: #{tpu_custom_call.1} parent=1 // pred_check
      _
    $region51: #{tpu_custom_call.1} parent=1 // pred_check_branch
      %720 = sbr.rel (0) target = $region53
    $region52: #{tpu_custom_call.1} parent=1 // pred_region
      %721 = dma.done [#allocation3], 32
    $region53: #{tpu_custom_call.1} parent=1 // pred_fallthru
      _
    %722 = vsyncpa [#allocation3], 1

</llo_original>
